<compile_context>
chip_gen: v7x
topology: tpu7x:2x2x1
jax: 0.10.0
libtpu: 0.0.40
codegen_flags: <defaults>
</compile_context>

<pallas_src>
import jax
import jax.numpy as jnp
from jax import lax
from jax.experimental import pallas as pl
from jax.experimental.pallas import tpu as pltpu


def mtldlr_kernel(x_ref, b_ref, w_ref, bias_ref, o_ref):
    # x_ref:    (T*n, d)  all tasks' inputs, task-major rows (row r -> task r // n)
    # b_ref:    (d, k)    shared low-rank factor
    # w_ref:    (T, k)    stacked per-task Linear(k, 1) weights
    # bias_ref: (1, T)    stacked per-task Linear biases
    # o_ref:    (1, T*n)  task-major output row (matches torch.cat order)
    Tn, _ = x_ref.shape
    T = w_ref.shape[0]
    n = Tn // T

    # Fold the per-task heads into the shared factor (tiny MXU push, contract on k).
    bw = lax.dot_general(
        b_ref[...], w_ref[...],
        dimension_numbers=(((1,), (1,)), ((), ())),
        preferred_element_type=jnp.float32,
    )  # (d, T)

    # Single main MXU pass: scores for every (row, task) pair, plus fused bias.
    full = jnp.dot(x_ref[...], bw, preferred_element_type=jnp.float32)  # (T*n, T)
    full = full + bias_ref[...]                                          # bcast (1, T)

    # Pick column (r // n) of row r: range compares (VPU) + lane reduce (XLU).
    row = lax.broadcasted_iota(jnp.int32, (Tn, T), 0)
    col = lax.broadcasted_iota(jnp.int32, (Tn, T), 1)
    mask = (row >= col * n) & (row < (col + 1) * n)
    picked = jnp.sum(jnp.where(mask, full, 0.0), axis=1)                 # (T*n,)

    o_ref[...] = picked.reshape(1, Tn)


def mtldlr_forward(X, B, W_weight, W_bias):
    """X: (T, n, d); B: (d, k); W_weight: (T, k); W_bias: (T,)  ->  (T*n,)."""
    T, n, d = X.shape
    k = B.shape[1]
    # The kernel's diagonal pick assumes task-major contiguous rows: row r -> task r//n.
    assert X.shape == (T, n, d) and W_weight.shape == (T, k) and W_bias.shape == (T,)

    X_flat = X.reshape(T * n, d)
    bias_row = W_bias.reshape(1, T)

    out_row = pl.pallas_call(
        mtldlr_kernel,
        out_shape=jax.ShapeDtypeStruct((1, T * n), jnp.float32),
        grid=(1,),  # whole problem fits in a few vregs -> one step
        in_specs=[
            pl.BlockSpec((T * n, d), lambda i: (0, 0)),  # full X slab
            pl.BlockSpec((d, k), lambda i: (0, 0)),      # shared factor B
            pl.BlockSpec((T, k), lambda i: (0, 0)),      # stacked head weights
            pl.BlockSpec((1, T), lambda i: (0, 0)),      # stacked head biases
        ],
        out_specs=pl.BlockSpec((1, T * n), lambda i: (0, 0)),
        compiler_params=pltpu.CompilerParams(
            dimension_semantics=("arbitrary",)),
    )(X_flat, B, W_weight, bias_row)

    # torch.cat of per-task squeezed (n,) vectors -> (T*n,)
    return out_row.reshape(T * n)


if __name__ == "__main__":
    # configs: d=16, k=32, nT=3; per-task batch n=8
    d, k, T, n = 16, 32, 3, 8

    key = jax.random.PRNGKey(0)
    k_x, k_B, k_w, k_b = jax.random.split(key, 4)

    X = jax.random.normal(k_x, (T, n, d), dtype=jnp.float32)
    # self.B = nn.Parameter(torch.randn(d, k))
    B = jax.random.normal(k_B, (d, k), dtype=jnp.float32)
    # Each TaskPredict: nn.Linear(k, 1) -> weight (1, k), bias (1); stacked over T.
    bound = 1.0 / jnp.sqrt(k)
    W_weight = jax.random.uniform(k_w, (T, k), jnp.float32, -bound, bound)
    W_bias = jax.random.uniform(k_b, (T,), jnp.float32, -bound, bound)

    out = mtldlr_forward(X, B, W_weight, W_bias)
    out = jax.block_until_ready(out)

    # Pure-JAX reference.  The in-kernel fold (x@B)@w == x@(B@w) re-associates
    # the k=32 contraction, so expect ~1e-6..1e-5 drift; 1e-4 covers it.
    rep = jnp.einsum("tnd,dk->tnk", X, B)
    ref = (jnp.einsum("tnk,tk->tn", rep, W_weight) + W_bias[:, None]).reshape(T * n)
    assert out.shape == (T * n,)
    assert jnp.allclose(out, ref, atol=1e-4, rtol=1e-4)

    print("KERNEL_OK")
</pallas_src>

<mosaic_0001>
module attributes {stable_mosaic.version = 11 : i64} {
  func.func @mtldlr_kernel(%arg0: i32, %arg1: memref<24x16xf32, #tpu.memory_space<vmem>>, %arg2: memref<16x32xf32, #tpu.memory_space<vmem>>, %arg3: memref<3x32xf32, #tpu.memory_space<vmem>>, %arg4: memref<1x3xf32, #tpu.memory_space<vmem>>, %arg5: memref<1x24xf32, #tpu.memory_space<vmem>>) attributes {dimension_semantics = [#tpu.dimension_semantics<arbitrary>], iteration_bounds = array<i64: 1>, scalar_prefetch = 0 : i64, scratch_operands = 0 : i64, tpu.core_type = #tpu.core_type<tc>, window_params = [{pipeline_mode = #tpu.pipeline_mode<synchronous>, transform_indices = @transform_0, window_bounds = array<i64: 24, 16>}, {pipeline_mode = #tpu.pipeline_mode<synchronous>, transform_indices = @transform_1, window_bounds = array<i64: 16, 32>}, {pipeline_mode = #tpu.pipeline_mode<synchronous>, transform_indices = @transform_2, window_bounds = array<i64: 3, 32>}, {pipeline_mode = #tpu.pipeline_mode<synchronous>, transform_indices = @transform_3, window_bounds = array<i64: 1, 3>}, {pipeline_mode = #tpu.pipeline_mode<synchronous>, transform_indices = @transform_4, window_bounds = array<i64: 1, 24>}]} {
    %c0 = arith.constant 0 : index
    %c0_0 = arith.constant 0 : index
    %0 = vector.load %arg2[%c0, %c0_0] : memref<16x32xf32, #tpu.memory_space<vmem>>, vector<16x32xf32>
    %c0_1 = arith.constant 0 : index
    %c0_2 = arith.constant 0 : index
    %1 = vector.load %arg3[%c0_1, %c0_2] : memref<3x32xf32, #tpu.memory_space<vmem>>, vector<3x32xf32>
    %cst = arith.constant dense<0.000000e+00> : vector<16x3xf32>
    %2 = tpu.matmul %0, %1, %cst {dimension_numbers = #tpu.dot_dimension_numbers<[1], [1], [0], [0], [0, 0, 1, 0], [], []>} : vector<16x32xf32>, vector<3x32xf32>, vector<16x3xf32> -> vector<16x3xf32>
    %c0_3 = arith.constant 0 : index
    %c0_4 = arith.constant 0 : index
    %3 = vector.load %arg1[%c0_3, %c0_4] : memref<24x16xf32, #tpu.memory_space<vmem>>, vector<24x16xf32>
    %cst_5 = arith.constant dense<0.000000e+00> : vector<24x3xf32>
    %4 = tpu.matmul %3, %2, %cst_5 {dimension_numbers = #tpu.dot_dimension_numbers<[1], [0], [0], [1], [0, 0, 1, 1], [], []>} : vector<24x16xf32>, vector<16x3xf32>, vector<24x3xf32> -> vector<24x3xf32>
    %c0_6 = arith.constant 0 : index
    %c0_7 = arith.constant 0 : index
    %5 = vector.load %arg4[%c0_6, %c0_7] : memref<1x3xf32, #tpu.memory_space<vmem>>, vector<1x3xf32>
    %6 = vector.broadcast %5 : vector<1x3xf32> to vector<24x3xf32>
    %7 = arith.addf %4, %6 : vector<24x3xf32>
    %8 = tpu.iota {dimensions = array<i32: 0>} : vector<24x3xi32>
    %9 = tpu.iota {dimensions = array<i32: 1>} : vector<24x3xi32>
    %c8_i32 = arith.constant 8 : i32
    %10 = vector.broadcast %c8_i32 : i32 to vector<24x3xi32>
    %11 = arith.muli %9, %10 : vector<24x3xi32>
    %12 = arith.cmpi sge, %8, %11 : vector<24x3xi32>
    %c1_i32 = arith.constant 1 : i32
    %13 = vector.broadcast %c1_i32 : i32 to vector<24x3xi32>
    %14 = arith.addi %9, %13 : vector<24x3xi32>
    %c8_i32_8 = arith.constant 8 : i32
    %15 = vector.broadcast %c8_i32_8 : i32 to vector<24x3xi32>
    %16 = arith.muli %14, %15 : vector<24x3xi32>
    %17 = arith.cmpi slt, %8, %16 : vector<24x3xi32>
    %18 = arith.andi %12, %17 : vector<24x3xi1>
    %cst_9 = arith.constant 0.000000e+00 : f32
    %19 = vector.broadcast %cst_9 : f32 to vector<24x3xf32>
    %20 = arith.select %18, %7, %19 : vector<24x3xi1>, vector<24x3xf32>
    %cst_10 = arith.constant dense<0.000000e+00> : vector<24xf32>
    %21 = vector.multi_reduction <add>, %20, %cst_10 [1] : vector<24x3xf32> to vector<24xf32>
    %22 = vector.shape_cast %21 : vector<24xf32> to vector<1x24xf32>
    %c0_11 = arith.constant 0 : index
    %c0_12 = arith.constant 0 : index
    %23 = vector.load %arg5[%c0_11, %c0_12] : memref<1x24xf32, #tpu.memory_space<vmem>>, vector<1x24xf32>
    tpu.vector_store %arg5[%c0_11, %c0_12], %22 {strides = array<i32>} : memref<1x24xf32, #tpu.memory_space<vmem>>, vector<1x24xf32>,
    return
  }
  func.func @transform_0(%arg0: i32) -> (i32, i32) {
    %c0_i32 = arith.constant 0 : i32
    %c0_i32_0 = arith.constant 0 : i32
    %c0_i32_1 = arith.constant 0 : i32
    return %c0_i32, %c0_i32_0 : i32, i32
  }
  func.func @transform_1(%arg0: i32) -> (i32, i32) {
    %c0_i32 = arith.constant 0 : i32
    %c0_i32_0 = arith.constant 0 : i32
    %c0_i32_1 = arith.constant 0 : i32
    return %c0_i32, %c0_i32_0 : i32, i32
  }
  func.func @transform_2(%arg0: i32) -> (i32, i32) {
    %c0_i32 = arith.constant 0 : i32
    %c0_i32_0 = arith.constant 0 : i32
    %c0_i32_1 = arith.constant 0 : i32
    return %c0_i32, %c0_i32_0 : i32, i32
  }
  func.func @transform_3(%arg0: i32) -> (i32, i32) {
    %c0_i32 = arith.constant 0 : i32
    %c0_i32_0 = arith.constant 0 : i32
    %c0_i32_1 = arith.constant 0 : i32
    return %c0_i32, %c0_i32_0 : i32, i32
  }
  func.func @transform_4(%arg0: i32) -> (i32, i32) {
    %c0_i32 = arith.constant 0 : i32
    %c0_i32_0 = arith.constant 0 : i32
    %c0_i32_1 = arith.constant 0 : i32
    return %c0_i32, %c0_i32_0 : i32, i32
  }
}

</mosaic_0001>

<llo_original>
// kernel: tpu_custom_call.1
$region0: #{tpu_custom_call.1}
  #allocation0 [shape = 'u32[]', space=smem, size = 0x4, offset = 0x4, fixed_abs, tag = 'smem constant byte address 0x4 - core index']
  #allocation1 [shape = 'u32[144,128]{1,0:T(1,128)}', space=vmem, size = 0x12000, scoped, tag = 'internal scratch']
  %s0 = inlined_call_operand.vmem [shape: f32[24,16], index: 0, kind: input, shape index: {}]
  %s1 = inlined_call_operand.vmem [shape: f32[16,32], index: 1, kind: input, shape index: {}]
  %s2 = inlined_call_operand.vmem [shape: f32[3,32], index: 2, kind: input, shape index: {}]
  %s3 = inlined_call_operand.vmem [shape: f32[1,3], index: 3, kind: input, shape index: {}]
  %s4 = inlined_call_operand.hbm [shape: f32[1,24], index: 4, kind: output, shape index: {}]
  %s5 = sld [smem:[#allocation0]]
  $region26: #{tpu_custom_call.1} parent=0
    _
  %s7 = ssub.s32 1, %s5
  %s8 = scalar_select 0, %s7, %s5
  $region1: #{tpu_custom_call.1} parent=0
    #allocation2 [shape = 'u8[512]{0}', space=vmem, size = 0x400, scoped, tag = 'output window, operand 0, single buffered']
    #allocation3 [shape = 's32[1]{0}', space=sflag, size = 0x4, scoped, tag = 'scoped memory for tpu_custom_call.1']
    %9 = vsyncpa [#allocation3], 0
    // Predicated region
    $region2: #{tpu_custom_call.1} parent=1 // pred_check
      _
    $region3: #{tpu_custom_call.1} parent=1 // pred_check_branch
      %11 = sbr.rel (0) target = $region5
    $region4: #{tpu_custom_call.1} parent=1 // pred_region
      _
    $region5: #{tpu_custom_call.1} parent=1 // pred_fallthru
      _
    // Predicated region
    $region6: #{tpu_custom_call.1} parent=1 // pred_check
      _
    $region7: #{tpu_custom_call.1} parent=1 // pred_check_branch
      %13 = sbr.rel (0) target = $region9
    $region8: #{tpu_custom_call.1} parent=1 // pred_region
      _
    $region9: #{tpu_custom_call.1} parent=1 // pred_fallthru
      _
    // Predicated region
    $region10: #{tpu_custom_call.1} parent=1 // pred_check
      _
    $region11: #{tpu_custom_call.1} parent=1 // pred_check_branch
      %15 = sbr.rel (0) target = $region13
    $region12: #{tpu_custom_call.1} parent=1 // pred_region
      _
    $region13: #{tpu_custom_call.1} parent=1 // pred_fallthru
      _
    // Predicated region
    $region14: #{tpu_custom_call.1} parent=1 // pred_check
      _
    $region15: #{tpu_custom_call.1} parent=1 // pred_check_branch
      %17 = sbr.rel (0) target = $region17
    $region16: #{tpu_custom_call.1} parent=1 // pred_region
      _
    $region17: #{tpu_custom_call.1} parent=1 // pred_fallthru
      _
    %v18 = vld [vmem:[%s1] sm:$0xff]
    %v19 = vld [vmem:[%s1 + $0x8] sm:$0xff]
    %v20 = vld [vmem:[%s2] sm:$0x7]
    %vm21 = vcmask 261120
    %v23 = vsel %vm21, %v18, 0
    %v26 = vsel %vm21, %v19, 0
    %v29 = vsel %vm21, %v20, 0
    %31 = vmatprep.subr.mxu0 0.0
    %32 = vmatpush1.xpose.msra.mxu0 %v29
    %33 = vmatprep.subr.mxu0 0.0
    %34 = vmatpush1.xpose.msra.mxu0 0.0
    %35 = vmatprep.subr.mxu0 0.0
    %36 = vmatpush1.xpose.msra.mxu0 0.0
    %37 = vmatprep.subr.mxu0 0.0
    %38 = vmatpush1.xpose.msra.mxu0 0.0
    %39 = vmatprep.subr.mxu0 0.0
    %40 = vmatpush1.xpose.msra.mxu0 0.0
    %41 = vmatprep.subr.mxu0 0.0
    %42 = vmatpush1.xpose.msra.mxu0 0.0
    %43 = vmatprep.subr.mxu0 0.0
    %44 = vmatpush1.xpose.msra.mxu0 0.0
    %45 = vmatprep.subr.mxu0 0.0
    %46 = vmatpush1.xpose.msra.mxu0 0.0
    %47 = vmatprep.subr.mxu0 0.0
    %48 = vmatpush1.xpose.msra.mxu0 0.0
    %49 = vmatprep.subr.mxu0 0.0
    %50 = vmatpush1.xpose.msra.mxu0 0.0
    %51 = vmatprep.subr.mxu0 0.0
    %52 = vmatpush1.xpose.msra.mxu0 0.0
    %53 = vmatprep.subr.mxu0 0.0
    %54 = vmatpush1.xpose.msra.mxu0 0.0
    %55 = vmatprep.subr.mxu0 0.0
    %56 = vmatpush1.xpose.msra.mxu0 0.0
    %57 = vmatprep.subr.mxu0 0.0
    %58 = vmatpush1.xpose.msra.mxu0 0.0
    %59 = vmatprep.subr.mxu0 0.0
    %60 = vmatpush1.xpose.msra.mxu0 0.0
    %61 = vmatprep.subr.mxu0 0.0
    %62 = vmatpush1.xpose.msra.mxu0 0.0
    %63 = vmatprep.subr.mxu0 0.0
    %64 = vmatpush1.xpose.msra.mxu0 0.0
    %65 = vmatprep.subr.mxu0 0.0
    %66 = vmatpush1.xpose.msra.mxu0 0.0
    %67 = vmatprep.subr.mxu0 0.0
    %68 = vmatpush1.xpose.msra.mxu0 0.0
    %69 = vmatprep.subr.mxu0 0.0
    %70 = vmatpush1.xpose.msra.mxu0 0.0
    %71 = vmatprep.subr.mxu0 0.0
    %72 = vmatpush1.xpose.msra.mxu0 0.0
    %73 = vmatprep.subr.mxu0 0.0
    %74 = vmatpush1.xpose.msra.mxu0 0.0
    %75 = vmatprep.subr.mxu0 0.0
    %76 = vmatpush1.xpose.msra.mxu0 0.0
    %77 = vmatprep.subr.mxu0 0.0
    %78 = vmatpush1.xpose.msra.mxu0 0.0
    %79 = vmatprep.subr.mxu0 0.0
    %80 = vmatpush1.xpose.msra.mxu0 0.0
    %81 = vmatprep.subr.mxu0 0.0
    %82 = vmatpush1.xpose.msra.mxu0 0.0
    %83 = vmatprep.subr.mxu0 0.0
    %84 = vmatpush1.xpose.msra.mxu0 0.0
    %85 = vmatprep.subr.mxu0 0.0
    %86 = vmatpush1.xpose.msra.mxu0 0.0
    %87 = vmatprep.subr.mxu0 0.0
    %88 = vmatpush1.xpose.msra.mxu0 0.0
    %89 = vmatprep.subr.mxu0 0.0
    %90 = vmatpush1.xpose.msra.mxu0 0.0
    %91 = vmatprep.subr.mxu0 0.0
    %92 = vmatpush1.xpose.msra.mxu0 0.0
    %93 = vmatprep.subr.mxu0 0.0
    %94 = vmatpush1.xpose.msra.mxu0 0.0
    %95 = vmatprep.mubr.f32.mxu0 0.0
    %96 = vmatmul.mubr.f32.gmra.mrb[0].mxu0 %v23
    %v97 = vpop.f32.mrb[0].mxu0
    %v98 = vadd.f32 0.0, %v97
    %v99 = vpop.f32.mrb[0].mxu0
    %100 = vmatprep.mubr.f32.mxu0 0.0
    %101 = vmatmul.mubr.f32.gmra.mrb[0].mxu0 %v26
    %v102 = vpop.f32.mrb[0].mxu0
    %v103 = vadd.f32 0.0, %v102
    %v104 = vpop.f32.mrb[0].mxu0
    %105 = vdwg.mxu0
    %v106 = vld [vmem:[%s0] sm:$0xff]
    %v107 = vld [vmem:[%s0 + $0x8] sm:$0xff]
    %v108 = vld [vmem:[%s0 + $0x10] sm:$0xff]
    %v109 = vld [vmem:[%s3] sm:$0x1]
    %v111 = vlaneseq
    %v112 = vshrl.u32 %v111, 7
    %v113 = vsub.s32 0, %v112
    %v114 = vrot.slane %v109, %v113
    %vm116 = vcmask 130048
    %v118 = vsel %vm116, %v106, 0
    %v121 = vsel %vm116, %v107, 0
    %v124 = vsel %vm116, %v108, 0
    %126 = vmatprep.subr.mxu0 0.0
    %127 = vmatpush1.msra.mxu0 %v98
    %128 = vmatprep.subr.mxu0 0.0
    %129 = vmatpush1.msra.mxu0 %v103
    %130 = vmatprep.subr.mxu0 0.0
    %131 = vmatpush1.msra.mxu0 0.0
    %132 = vmatprep.subr.mxu0 0.0
    %133 = vmatpush1.msra.mxu0 0.0
    %134 = vmatprep.subr.mxu0 0.0
    %135 = vmatpush1.msra.mxu0 0.0
    %136 = vmatprep.subr.mxu0 0.0
    %137 = vmatpush1.msra.mxu0 0.0
    %138 = vmatprep.subr.mxu0 0.0
    %139 = vmatpush1.msra.mxu0 0.0
    %140 = vmatprep.subr.mxu0 0.0
    %141 = vmatpush1.msra.mxu0 0.0
    %142 = vmatprep.subr.mxu0 0.0
    %143 = vmatpush1.msra.mxu0 0.0
    %144 = vmatprep.subr.mxu0 0.0
    %145 = vmatpush1.msra.mxu0 0.0
    %146 = vmatprep.subr.mxu0 0.0
    %147 = vmatpush1.msra.mxu0 0.0
    %148 = vmatprep.subr.mxu0 0.0
    %149 = vmatpush1.msra.mxu0 0.0
    %150 = vmatprep.subr.mxu0 0.0
    %151 = vmatpush1.msra.mxu0 0.0
    %152 = vmatprep.subr.mxu0 0.0
    %153 = vmatpush1.msra.mxu0 0.0
    %154 = vmatprep.subr.mxu0 0.0
    %155 = vmatpush1.msra.mxu0 0.0
    %156 = vmatprep.subr.mxu0 0.0
    %157 = vmatpush1.msra.mxu0 0.0
    %158 = vmatprep.subr.mxu0 0.0
    %159 = vmatpush1.msra.mxu0 0.0
    %160 = vmatprep.subr.mxu0 0.0
    %161 = vmatpush1.msra.mxu0 0.0
    %162 = vmatprep.subr.mxu0 0.0
    %163 = vmatpush1.msra.mxu0 0.0
    %164 = vmatprep.subr.mxu0 0.0
    %165 = vmatpush1.msra.mxu0 0.0
    %166 = vmatprep.subr.mxu0 0.0
    %167 = vmatpush1.msra.mxu0 0.0
    %168 = vmatprep.subr.mxu0 0.0
    %169 = vmatpush1.msra.mxu0 0.0
    %170 = vmatprep.subr.mxu0 0.0
    %171 = vmatpush1.msra.mxu0 0.0
    %172 = vmatprep.subr.mxu0 0.0
    %173 = vmatpush1.msra.mxu0 0.0
    %174 = vmatprep.subr.mxu0 0.0
    %175 = vmatpush1.msra.mxu0 0.0
    %176 = vmatprep.subr.mxu0 0.0
    %177 = vmatpush1.msra.mxu0 0.0
    %178 = vmatprep.subr.mxu0 0.0
    %179 = vmatpush1.msra.mxu0 0.0
    %180 = vmatprep.subr.mxu0 0.0
    %181 = vmatpush1.msra.mxu0 0.0
    %182 = vmatprep.subr.mxu0 0.0
    %183 = vmatpush1.msra.mxu0 0.0
    %184 = vmatprep.subr.mxu0 0.0
    %185 = vmatpush1.msra.mxu0 0.0
    %186 = vmatprep.subr.mxu0 0.0
    %187 = vmatpush1.msra.mxu0 0.0
    %188 = vmatprep.subr.mxu0 0.0
    %189 = vmatpush1.msra.mxu0 0.0
    %190 = vmatprep.mubr.f32.mxu0 0.0
    %191 = vmatmul.mubr.f32.gmra.mrb[0].mxu0 %v118
    %v192 = vpop.f32.mrb[0].mxu0
    %v193 = vadd.f32 %v114, %v192
    %v194 = vpop.f32.mrb[0].mxu0
    %195 = vmatprep.mubr.f32.mxu0 0.0
    %196 = vmatmul.mubr.f32.gmra.mrb[0].mxu0 %v121
    %v197 = vpop.f32.mrb[0].mxu0
    %v198 = vadd.f32 %v114, %v197
    %v199 = vpop.f32.mrb[0].mxu0
    %200 = vmatprep.mubr.f32.mxu0 0.0
    %201 = vmatmul.mubr.f32.gmra.mrb[0].mxu0 %v124
    %v202 = vpop.f32.mrb[0].mxu0
    %v203 = vadd.f32 %v114, %v202
    %v204 = vpop.f32.mrb[0].mxu0
    %205 = vdwg.mxu0
    %v206 = vlaneseq
    %v207 = vshrl.u32 %v206, 7
    %v208 = vadd.s32 %v207, 8
    %v209 = vadd.s32 %v207, 16
    %v210 = vlaneseq
    %v211 = vand.u32 %v210, 127
    %v212 = vmul.u32 %v211, 8
    %vm213 = vcmp.ge.s32.totalorder %v207, %v212
    %vm214 = vcmp.ge.s32.totalorder %v208, %v212
    %vm215 = vcmp.ge.s32.totalorder %v209, %v212
    %v216 = vadd.s32 %v211, 1
    %v217 = vmul.u32 %v216, 8
    %vm218 = vcmp.lt.s32.totalorder %v207, %v217
    %vm219 = vcmp.lt.s32.totalorder %v208, %v217
    %vm220 = vcmp.lt.s32.totalorder %v209, %v217
    %vm221 = vmand %vm213, %vm218
    %vm222 = vmand %vm214, %vm219
    %vm223 = vmand %vm215, %vm220
    %v224 = vsel %vm221, %v193, 0.0
    %v225 = vsel %vm222, %v198, 0.0
    %v226 = vsel %vm223, %v203, 0.0
    %vm227 = vcmask 23552
    %v228 = vsel %vm227, %v224, 0.0
    %229 = vadd.xlane.f32.xlu0 %v228
    %v230 = vpop.xlane.xlu0 %229
    %v231 = vsel %vm227, %v225, 0.0
    %232 = vadd.xlane.f32.xlu0 %v231
    %v233 = vpop.xlane.xlu0 %232
    %v234 = vsel %vm227, %v226, 0.0
    %235 = vadd.xlane.f32.xlu0 %v234
    %v236 = vpop.xlane.xlu0 %235
    %v240 = vlaneseq
    %v241 = vshrl.u32 %v240, 7
    %v242 = vsub.s32 %v211, %v241
    %v243 = vrot.slane %v230, %v242
    %v244 = vadd.s32 %v211, 4294967288
    %v245 = vlaneseq
    %v246 = vshrl.u32 %v245, 7
    %v247 = vsub.s32 %v244, %v246
    %v248 = vrot.slane %v233, %v247
    %vm249 = vcmask 130112
    %v250 = vsel %vm249, %v248, %v243
    %v251 = vadd.s32 %v211, 4294967280
    %v252 = vlaneseq
    %v253 = vshrl.u32 %v252, 7
    %v254 = vsub.s32 %v251, %v253
    %v255 = vrot.slane %v236, %v254
    %vm256 = vcmask 195712
    %v257 = vsel %vm256, %v255, %v250
    %vm259 = vcmask 188416
    %260 = vst.msk [vmem:[#allocation2] sm:$0x1] %vm259, %v257
    // Predicated region
    $region18: #{tpu_custom_call.1} parent=1 // pred_check
      _
    $region19: #{tpu_custom_call.1} parent=1 // pred_check_branch
      %262 = sbr.rel (0) target = $region21
    $region20: #{tpu_custom_call.1} parent=1 // pred_region
      %s264 = ssub.s32 16, 16
      %265 = vsyncadd [#allocation3], %s264
      %s267 = sshll.u32 [#allocation2], 4
      %s268 = int_to_ptr.vmem [resolvable:$true] %s267
      %270 = dma.vmem_to_hbm [thread:$0]  %s268, 16, %s4, [#allocation3]
    $region21: #{tpu_custom_call.1} parent=1 // pred_fallthru
      _
    // Predicated region
    $region22: #{tpu_custom_call.1} parent=1 // pred_check
      _
    $region23: #{tpu_custom_call.1} parent=1 // pred_check_branch
      %272 = sbr.rel (0) target = $region25
    $region24: #{tpu_custom_call.1} parent=1 // pred_region
      %273 = dma.done [#allocation3], 16
    $region25: #{tpu_custom_call.1} parent=1 // pred_fallthru
      _
    %274 = vsyncpa [#allocation3], 1

</llo_original>
